<compile_context>
chip_gen: v5e
topology: v5e:2x2
jax: 0.10.0
libtpu: 0.0.40
codegen_flags: <defaults>
</compile_context>

<pallas_src>
import functools
from typing import NamedTuple

import jax
import jax.numpy as jnp
from jax.experimental import pallas as pl
from jax.experimental.pallas import tpu as pltpu

_LANE = 128     # lane width of a vreg (last dim)
_SUBLANE = 8    # f32 sublane tile (second-to-last dim)


def _round_up(x, m):
    return ((x + m - 1) // m) * m


def _mlp_kernel(x_ref, w0_ref, wrest_ref, bias_ref, o_ref, *, n_hidden):
    """Fused MLP forward, fully VMEM-resident, single invocation (no grid).

    x_ref:    (B_pad, Din)            -- Din left unpadded
    w0_ref:   (Din, H_pad)            -- first layer weight, lane-padded output
    wrest_ref:(n_hidden, H_pad, H_pad)-- layers 1..n_hidden stacked (zero-padded)
    bias_ref: (n_hidden+1, 1, H_pad)  -- all biases stacked, f32
    o_ref:    (B_pad, H_pad)          -- lane-dense logits (extra cols are zero)
    """
    n_total = n_hidden + 1

    # Layer 0: K = input_dim (unpadded is fine for the MXU), lane-padded output.
    h = jnp.dot(x_ref[...].astype(w0_ref.dtype), w0_ref[...],
                preferred_element_type=jnp.float32)
    h = h + bias_ref[0]
    if n_hidden > 0:
        h = jnp.maximum(h, 0.0)

    # Remaining layers: square padded slabs, static-unrolled loop.
    for i in range(1, n_total):
        h = jnp.dot(h.astype(wrest_ref.dtype), wrest_ref[i - 1],
                    preferred_element_type=jnp.float32)
        h = h + bias_ref[i]
        if i < n_hidden:
            h = jnp.maximum(h, 0.0)

    # TODO(synk): training-mode dropout (scaled mask via pltpu.prng_seed /
    # prng_random_bits) intentionally omitted; inference forward is identity.
    o_ref[...] = h.astype(o_ref.dtype)


class PackedNet(NamedTuple):
    w0: jax.Array        # (input_dim, H_pad)
    w_rest: jax.Array    # (n_hidden, H_pad, H_pad)
    b_all: jax.Array     # (n_hidden+1, 1, H_pad), float32
    n_hidden: int
    n_classes: int


def pack_params(params, compute_dtype=jnp.float32):
    """One-time parameter prep: zero-pad lane dims and stack into 3 arrays.

    params: list of (w [in_features, out_features], b [out_features]).
    Zero-padded weight cols + zero bias give zero activations; ReLU(0)=0 and the
    zero-padded weight rows downstream keep the math exact; padded logit columns
    are sliced off in the forward wrapper.
    """
    n_total = len(params)
    n_hidden = n_total - 1
    assert n_hidden >= 1, "expects at least one hidden layer (n_layers >= 1)"

    out_dims = [w.shape[1] for (w, _) in params]
    H_pad = max(_round_up(d, _LANE) for d in out_dims)
    n_classes = out_dims[-1]

    w0, b0 = params[0]
    w0_p = jnp.pad(w0.astype(compute_dtype), ((0, 0), (0, H_pad - w0.shape[1])))

    w_rest = []
    for (w, _) in params[1:]:
        din, dout = w.shape
        w_rest.append(jnp.pad(w.astype(compute_dtype),
                              ((0, H_pad - din), (0, H_pad - dout))))
    w_rest = jnp.stack(w_rest)                                   # (n_hidden, H_pad, H_pad)

    b_all = jnp.stack([jnp.pad(b.astype(jnp.float32), (0, H_pad - b.shape[0]))
                       for (_, b) in params])                    # (n_total, H_pad)
    b_all = b_all.reshape(n_total, 1, H_pad)

    return PackedNet(w0_p, w_rest, b_all, n_hidden, n_classes)


@functools.partial(jax.jit, static_argnums=(4, 5))
def _forward_impl(x, w0, w_rest, b_all, n_hidden, n_classes):
    B = x.shape[0]
    H_pad = b_all.shape[-1]
    B_pad = _round_up(B, _SUBLANE)
    if B_pad != B:
        x = jnp.pad(x, ((0, B_pad - B), (0, 0)))   # only the batch (sublane) dim

    out_p = pl.pallas_call(
        functools.partial(_mlp_kernel, n_hidden=n_hidden),
        out_shape=jax.ShapeDtypeStruct((B_pad, H_pad), jnp.float32),
        in_specs=[pl.BlockSpec(memory_space=pltpu.MemorySpace.VMEM)] * 4,
        out_specs=pl.BlockSpec(memory_space=pltpu.MemorySpace.VMEM),
    )(x, w0, w_rest, b_all)

    return out_p[:B, :n_classes]


def net_forward(x, packed: PackedNet):
    """x: [B, input_dim] -> logits [B, n_classes]."""
    return _forward_impl(x, packed.w0, packed.w_rest, packed.b_all,
                         packed.n_hidden, packed.n_classes)


def init_net_params(key, input_dim, n_layers, n_units, n_classes, dtype=jnp.float32):
    """Deterministic init mirroring the module's layer shapes.
    NOTE: weights are stored [in_features, out_features] -- transpose of nn.Linear's
    [out, in]; transpose when porting real PyTorch weights."""
    params = []
    current_dim = input_dim
    dims = [n_units] * n_layers + [n_classes]
    for out_dim in dims:
        key, kw, kb = jax.random.split(key, 3)
        bound = 1.0 / jnp.sqrt(jnp.asarray(current_dim, dtype))
        w = jax.random.uniform(kw, (current_dim, out_dim), dtype, -bound, bound)
        b = jax.random.uniform(kb, (out_dim,), dtype, -bound, bound)
        params.append((w, b))
        current_dim = out_dim
    return params


if __name__ == "__main__":
    # Small shapes consistent with the module: tabular input, MLP head.
    batch = 8
    input_dim = 32
    n_layers = 2
    n_units = 32
    n_classes = 4        # stands in for len(le.classes_)
    dropout = 0.1        # identity at inference

    key = jax.random.PRNGKey(0)
    key, kx = jax.random.split(key)
    x = jax.random.normal(kx, (batch, input_dim), dtype=jnp.float32)

    params = init_net_params(key, input_dim, n_layers, n_units, n_classes)
    packed = pack_params(params)               # one-time padding / stacking

    logits = net_forward(x, packed)
    jax.block_until_ready(logits)

    # Sanity check against pure-JAX reference
    ref = x
    for i, (w, b) in enumerate(params):
        ref = ref @ w + b
        if i < len(params) - 1:
            ref = jnp.maximum(ref, 0.0)
    assert logits.shape == (batch, n_classes)
    assert jnp.allclose(logits, ref, atol=1e-5, rtol=1e-5)

    print("KERNEL_OK")
</pallas_src>

<mosaic_0001>
module attributes {stable_mosaic.version = 11 : i64} {
  func.func @_mlp_kernel(%arg0: memref<8x32xf32, #tpu.memory_space<vmem>>, %arg1: memref<32x128xf32, #tpu.memory_space<vmem>>, %arg2: memref<2x128x128xf32, #tpu.memory_space<vmem>>, %arg3: memref<3x1x128xf32, #tpu.memory_space<vmem>>, %arg4: memref<8x128xf32, #tpu.memory_space<vmem>>) attributes {dimension_semantics = [], scalar_prefetch = 0 : i64, scratch_operands = 0 : i64, tpu.core_type = #tpu.core_type<tc>} {
    %c0 = arith.constant 0 : index
    %c0_0 = arith.constant 0 : index
    %0 = vector.load %arg0[%c0, %c0_0] : memref<8x32xf32, #tpu.memory_space<vmem>>, vector<8x32xf32>
    %c0_1 = arith.constant 0 : index
    %c0_2 = arith.constant 0 : index
    %1 = vector.load %arg1[%c0_1, %c0_2] : memref<32x128xf32, #tpu.memory_space<vmem>>, vector<32x128xf32>
    %cst = arith.constant dense<0.000000e+00> : vector<8x128xf32>
    %2 = tpu.matmul %0, %1, %cst {dimension_numbers = #tpu.dot_dimension_numbers<[1], [0], [0], [1], [0, 0, 1, 1], [], []>} : vector<8x32xf32>, vector<32x128xf32>, vector<8x128xf32> -> vector<8x128xf32>
    %c0_3 = arith.constant 0 : index
    %c0_4 = arith.constant 0 : index
    %c0_5 = arith.constant 0 : index
    %3 = vector.load %arg3[%c0_3, %c0_4, %c0_5] : memref<3x1x128xf32, #tpu.memory_space<vmem>>, vector<1x1x128xf32>
    %4 = vector.shape_cast %3 : vector<1x1x128xf32> to vector<1x128xf32>
    %5 = vector.broadcast %4 : vector<1x128xf32> to vector<8x128xf32>
    %6 = arith.addf %2, %5 : vector<8x128xf32>
    %cst_6 = arith.constant 0.000000e+00 : f32
    %7 = vector.broadcast %cst_6 : f32 to vector<8x128xf32>
    %8 = arith.maximumf %6, %7 : vector<8x128xf32>
    %c0_7 = arith.constant 0 : index
    %c0_8 = arith.constant 0 : index
    %c0_9 = arith.constant 0 : index
    %9 = vector.load %arg2[%c0_7, %c0_8, %c0_9] : memref<2x128x128xf32, #tpu.memory_space<vmem>>, vector<1x128x128xf32>
    %10 = vector.shape_cast %9 : vector<1x128x128xf32> to vector<128x128xf32>
    %cst_10 = arith.constant dense<0.000000e+00> : vector<8x128xf32>
    %11 = tpu.matmul %8, %10, %cst_10 {dimension_numbers = #tpu.dot_dimension_numbers<[1], [0], [0], [1], [0, 0, 1, 1], [], []>} : vector<8x128xf32>, vector<128x128xf32>, vector<8x128xf32> -> vector<8x128xf32>
    %c1 = arith.constant 1 : index
    %c0_11 = arith.constant 0 : index
    %c0_12 = arith.constant 0 : index
    %12 = vector.load %arg3[%c1, %c0_11, %c0_12] : memref<3x1x128xf32, #tpu.memory_space<vmem>>, vector<1x1x128xf32>
    %13 = vector.shape_cast %12 : vector<1x1x128xf32> to vector<1x128xf32>
    %14 = vector.broadcast %13 : vector<1x128xf32> to vector<8x128xf32>
    %15 = arith.addf %11, %14 : vector<8x128xf32>
    %cst_13 = arith.constant 0.000000e+00 : f32
    %16 = vector.broadcast %cst_13 : f32 to vector<8x128xf32>
    %17 = arith.maximumf %15, %16 : vector<8x128xf32>
    %c1_14 = arith.constant 1 : index
    %c0_15 = arith.constant 0 : index
    %c0_16 = arith.constant 0 : index
    %18 = vector.load %arg2[%c1_14, %c0_15, %c0_16] : memref<2x128x128xf32, #tpu.memory_space<vmem>>, vector<1x128x128xf32>
    %19 = vector.shape_cast %18 : vector<1x128x128xf32> to vector<128x128xf32>
    %cst_17 = arith.constant dense<0.000000e+00> : vector<8x128xf32>
    %20 = tpu.matmul %17, %19, %cst_17 {dimension_numbers = #tpu.dot_dimension_numbers<[1], [0], [0], [1], [0, 0, 1, 1], [], []>} : vector<8x128xf32>, vector<128x128xf32>, vector<8x128xf32> -> vector<8x128xf32>
    %c2 = arith.constant 2 : index
    %c0_18 = arith.constant 0 : index
    %c0_19 = arith.constant 0 : index
    %21 = vector.load %arg3[%c2, %c0_18, %c0_19] : memref<3x1x128xf32, #tpu.memory_space<vmem>>, vector<1x1x128xf32>
    %22 = vector.shape_cast %21 : vector<1x1x128xf32> to vector<1x128xf32>
    %23 = vector.broadcast %22 : vector<1x128xf32> to vector<8x128xf32>
    %24 = arith.addf %20, %23 : vector<8x128xf32>
    %c0_20 = arith.constant 0 : index
    %c0_21 = arith.constant 0 : index
    %25 = vector.load %arg4[%c0_20, %c0_21] : memref<8x128xf32, #tpu.memory_space<vmem>>, vector<8x128xf32>
    tpu.vector_store %arg4[%c0_20, %c0_21], %24 {strides = array<i32>} : memref<8x128xf32, #tpu.memory_space<vmem>>, vector<8x128xf32>,
    return
  }
}

</mosaic_0001>

<llo_original>
// kernel: _forward_impl.1
$region0: #{_forward_impl.1}
  #allocation0 [shape = 'u32[]', space=smem, size = 0x4, offset = 0x4, fixed_abs, tag = 'smem constant byte address 0x4 - core index']
  #allocation1 [shape = 'u32[72,128]{1,0:T(1,128)}', space=vmem, size = 0x9000, scoped, tag = 'internal scratch']
  %s0 = inlined_call_operand.hbm [shape: f32[8,32], index: 0, kind: input, shape index: {}]
  %s1 = inlined_call_operand.hbm [shape: f32[32,128], index: 1, kind: input, shape index: {}]
  %s2 = inlined_call_operand.hbm [shape: f32[2,128,128], index: 2, kind: input, shape index: {}]
  %s3 = inlined_call_operand.hbm [shape: f32[3,1,128], index: 3, kind: input, shape index: {}]
  %s4 = inlined_call_operand.vmem [shape: f32[8,128], index: 4, kind: output, shape index: {}]
  %s5 = sld [smem:[#allocation0]]
  $region42: #{_forward_impl.1} parent=0
    _
  %s7 = ssub.s32 1, %s5
  %s8 = scalar_select 0, %s7, %s5
  $region1: #{_forward_impl.1} parent=0
    #allocation2 [shape = 'u8[4096]{0}', space=vmem, size = 0x1000, scoped, tag = 'input window, operand 0, single buffered']
    #allocation3 [shape = 's32[1]{0}', space=sflag, size = 0x4, scoped, tag = 'scoped memory for _forward_impl.1']
    #allocation4 [shape = 'u8[16384]{0}', space=vmem, size = 0x4000, scoped, tag = 'input window, operand 1, single buffered']
    #allocation5 [shape = 's32[1]{0}', space=sflag, size = 0x4, scoped, tag = 'scoped memory for _forward_impl.1']
    #allocation6 [shape = 'u8[131072]{0}', space=vmem, size = 0x20000, scoped, tag = 'input window, operand 2, single buffered']
    #allocation7 [shape = 'u8[1536]{0}', space=vmem, size = 0x800, scoped, tag = 'input window, operand 3, single buffered']
    #allocation8 [shape = 's32[1]{0}', space=sflag, size = 0x4, scoped, tag = 'scoped memory for _forward_impl.1']
    %9 = vsyncpa [#allocation3], 0
    %10 = vsyncpa [#allocation5], 0
    %11 = vsyncpa [#allocation8], 0
    // Predicated region
    $region2: #{_forward_impl.1} parent=1 // pred_check
      _
    $region3: #{_forward_impl.1} parent=1 // pred_check_branch
      %13 = sbr.rel (0) target = $region5
    $region4: #{_forward_impl.1} parent=1 // pred_region
      %15 = vsyncadd [#allocation3], 0
      %s17 = sshll.u32 %s0, 4
      %s18 = int_to_ptr.hbm [resolvable:$true] %s17
      %s19 = sshll.u32 [#allocation2], 4
      %s20 = int_to_ptr.vmem [resolvable:$true] %s19
      %22 = dma.hbm_to_vmem [thread:$0]  %s18, 128, %s20, [#allocation3]
    $region5: #{_forward_impl.1} parent=1 // pred_fallthru
      _
    // Predicated region
    $region6: #{_forward_impl.1} parent=1 // pred_check
      _
    $region7: #{_forward_impl.1} parent=1 // pred_check_branch
      %24 = sbr.rel (0) target = $region9
    $region8: #{_forward_impl.1} parent=1 // pred_region
      %26 = vsyncadd [#allocation5], 0
      %s27 = sshll.u32 %s1, 4
      %s28 = int_to_ptr.hbm [resolvable:$true] %s27
      %s29 = sshll.u32 [#allocation4], 4
      %s30 = int_to_ptr.vmem [resolvable:$true] %s29
      %35 = dma.hbm_to_vmem [thread:$0]  %s28, 512, %s30, [#allocation5], 128, 128, 8
    $region9: #{_forward_impl.1} parent=1 // pred_fallthru
      _
    // Predicated region
    $region10: #{_forward_impl.1} parent=1 // pred_check
      _
    $region11: #{_forward_impl.1} parent=1 // pred_check_branch
      %37 = sbr.rel (0) target = $region13
    $region12: #{_forward_impl.1} parent=1 // pred_region
      %39 = vsyncadd [#allocation5], 0
      %s40 = sshll.u32 %s2, 4
      %s41 = int_to_ptr.hbm [resolvable:$true] %s40
      %s42 = sshll.u32 [#allocation6], 4
      %s43 = int_to_ptr.vmem [resolvable:$true] %s42
      %48 = dma.hbm_to_vmem [thread:$0]  %s41, 4096, %s43, [#allocation5], 128, 128, 8
    $region13: #{_forward_impl.1} parent=1 // pred_fallthru
      _
    // Predicated region
    $region14: #{_forward_impl.1} parent=1 // pred_check
      _
    $region15: #{_forward_impl.1} parent=1 // pred_check_branch
      %50 = sbr.rel (0) target = $region17
    $region16: #{_forward_impl.1} parent=1 // pred_region
      %52 = vsyncadd [#allocation8], 0
      %s53 = sshll.u32 %s3, 4
      %s54 = int_to_ptr.hbm [resolvable:$true] %s53
      %s55 = sshll.u32 [#allocation7], 4
      %s56 = int_to_ptr.vmem [resolvable:$true] %s55
      %61 = dma.hbm_to_vmem [thread:$0]  %s54, 48, %s56, [#allocation8], 16, 16, 1
    $region17: #{_forward_impl.1} parent=1 // pred_fallthru
      _
    // Predicated region
    $region18: #{_forward_impl.1} parent=1 // pred_check
      _
    $region19: #{_forward_impl.1} parent=1 // pred_check_branch
      %63 = sbr.rel (0) target = $region21
    $region20: #{_forward_impl.1} parent=1 // pred_region
      %65 = dma.done [#allocation3], 128
    $region21: #{_forward_impl.1} parent=1 // pred_fallthru
      _
    // Predicated region
    $region22: #{_forward_impl.1} parent=1 // pred_check
      _
    $region23: #{_forward_impl.1} parent=1 // pred_check_branch
      %67 = sbr.rel (0) target = $region25
    $region24: #{_forward_impl.1} parent=1 // pred_region
      %69 = dma.done [#allocation5], 512
    $region25: #{_forward_impl.1} parent=1 // pred_fallthru
      _
    // Predicated region
    $region26: #{_forward_impl.1} parent=1 // pred_check
      _
    $region27: #{_forward_impl.1} parent=1 // pred_check_branch
      %71 = sbr.rel (0) target = $region29
    $region28: #{_forward_impl.1} parent=1 // pred_region
      %73 = dma.done [#allocation5], 4096
    $region29: #{_forward_impl.1} parent=1 // pred_fallthru
      _
    // Predicated region
    $region30: #{_forward_impl.1} parent=1 // pred_check
      _
    $region31: #{_forward_impl.1} parent=1 // pred_check_branch
      %75 = sbr.rel (0) target = $region33
    $region32: #{_forward_impl.1} parent=1 // pred_region
      %77 = dma.done [#allocation8], 48
    $region33: #{_forward_impl.1} parent=1 // pred_fallthru
      _
    %v78 = vld [vmem:[#allocation2] sm:$0xff]
    %v79 = vld [vmem:[#allocation4] sm:$0xff]
    %v80 = vld [vmem:[#allocation4 + $0x8] sm:$0xff]
    %v81 = vld [vmem:[#allocation4 + $0x10] sm:$0xff]
    %v82 = vld [vmem:[#allocation4 + $0x18] sm:$0xff]
    %v83 = vld [vmem:[#allocation7] sm:$0x1]
    %v85 = vperm.slane %v83, 0
    %vm87 = vcmask 261120
    %v89 = vsel %vm87, %v78, 0
    %91 = vmatpush.msra.mxu0 0.0
    %92 = vmatpush.msra.mxu0 0.0
    %93 = vmatpush.msra.mxu0 0.0
    %94 = vmatpush.msra.mxu0 0.0
    %95 = vmatpush.msra.mxu0 0.0
    %96 = vmatpush.msra.mxu0 0.0
    %97 = vmatpush.msra.mxu0 0.0
    %98 = vmatpush.msra.mxu0 0.0
    %99 = vmatpush.msra.mxu0 0.0
    %100 = vmatpush.msra.mxu0 0.0
    %101 = vmatpush.msra.mxu0 0.0
    %102 = vmatpush.msra.mxu0 0.0
    %103 = vmatpush.msra.mxu0 %v82
    %104 = vmatpush.msra.mxu0 %v81
    %105 = vmatpush.msra.mxu0 %v80
    %106 = vmatpush.msra.mxu0 %v79
    %107 = vmatmul.f32.gmra.mxu0 %v89
    %v108 = vpop.f32.mrf.mxu0
    %v109 = vadd.f32 %v85, %v108
    %110 = vdwg.mxu0
    %v111 = vmax.f32 %v109, 0.0
    %v112 = vld [vmem:[#allocation6] sm:$0xff]
    %v113 = vld [vmem:[#allocation6 + $0x8] sm:$0xff]
    %v114 = vld [vmem:[#allocation6 + $0x10] sm:$0xff]
    %v115 = vld [vmem:[#allocation6 + $0x18] sm:$0xff]
    %v116 = vld [vmem:[#allocation6 + $0x20] sm:$0xff]
    %v117 = vld [vmem:[#allocation6 + $0x28] sm:$0xff]
    %v118 = vld [vmem:[#allocation6 + $0x30] sm:$0xff]
    %v119 = vld [vmem:[#allocation6 + $0x38] sm:$0xff]
    %v120 = vld [vmem:[#allocation6 + $0x40] sm:$0xff]
    %v121 = vld [vmem:[#allocation6 + $0x48] sm:$0xff]
    %v122 = vld [vmem:[#allocation6 + $0x50] sm:$0xff]
    %v123 = vld [vmem:[#allocation6 + $0x58] sm:$0xff]
    %v124 = vld [vmem:[#allocation6 + $0x60] sm:$0xff]
    %v125 = vld [vmem:[#allocation6 + $0x68] sm:$0xff]
    %v126 = vld [vmem:[#allocation6 + $0x70] sm:$0xff]
    %v127 = vld [vmem:[#allocation6 + $0x78] sm:$0xff]
    %s128 = scalar_lea.vmem [#allocation7], 1
    %v129 = vld [vmem:[%s128] sm:$0x1]
    %v131 = vperm.slane %v129, 0
    %133 = vmatpush.msra.mxu0 %v127
    %134 = vmatpush.msra.mxu0 %v126
    %135 = vmatpush.msra.mxu0 %v125
    %136 = vmatpush.msra.mxu0 %v124
    %137 = vmatpush.msra.mxu0 %v123
    %138 = vmatpush.msra.mxu0 %v122
    %139 = vmatpush.msra.mxu0 %v121
    %140 = vmatpush.msra.mxu0 %v120
    %141 = vmatpush.msra.mxu0 %v119
    %142 = vmatpush.msra.mxu0 %v118
    %143 = vmatpush.msra.mxu0 %v117
    %144 = vmatpush.msra.mxu0 %v116
    %145 = vmatpush.msra.mxu0 %v115
    %146 = vmatpush.msra.mxu0 %v114
    %147 = vmatpush.msra.mxu0 %v113
    %148 = vmatpush.msra.mxu0 %v112
    %149 = vmatmul.f32.gmra.mxu0 %v111
    %v150 = vpop.f32.mrf.mxu0
    %v151 = vadd.f32 %v131, %v150
    %152 = vdwg.mxu0
    %v153 = vmax.f32 %v151, 0.0
    %s154 = scalar_lea.vmem [#allocation6], 128
    %v155 = vld [vmem:[%s154] sm:$0xff]
    %v156 = vld [vmem:[%s154 + $0x8] sm:$0xff]
    %v157 = vld [vmem:[%s154 + $0x10] sm:$0xff]
    %v158 = vld [vmem:[%s154 + $0x18] sm:$0xff]
    %v159 = vld [vmem:[%s154 + $0x20] sm:$0xff]
    %v160 = vld [vmem:[%s154 + $0x28] sm:$0xff]
    %v161 = vld [vmem:[%s154 + $0x30] sm:$0xff]
    %v162 = vld [vmem:[%s154 + $0x38] sm:$0xff]
    %v163 = vld [vmem:[%s154 + $0x40] sm:$0xff]
    %v164 = vld [vmem:[%s154 + $0x48] sm:$0xff]
    %v165 = vld [vmem:[%s154 + $0x50] sm:$0xff]
    %v166 = vld [vmem:[%s154 + $0x58] sm:$0xff]
    %v167 = vld [vmem:[%s154 + $0x60] sm:$0xff]
    %v168 = vld [vmem:[%s154 + $0x68] sm:$0xff]
    %v169 = vld [vmem:[%s154 + $0x70] sm:$0xff]
    %v170 = vld [vmem:[%s154 + $0x78] sm:$0xff]
    %s171 = scalar_lea.vmem [#allocation7], 2
    %v172 = vld [vmem:[%s171] sm:$0x1]
    %v174 = vperm.slane %v172, 0
    %176 = vmatpush.msra.mxu0 %v170
    %177 = vmatpush.msra.mxu0 %v169
    %178 = vmatpush.msra.mxu0 %v168
    %179 = vmatpush.msra.mxu0 %v167
    %180 = vmatpush.msra.mxu0 %v166
    %181 = vmatpush.msra.mxu0 %v165
    %182 = vmatpush.msra.mxu0 %v164
    %183 = vmatpush.msra.mxu0 %v163
    %184 = vmatpush.msra.mxu0 %v162
    %185 = vmatpush.msra.mxu0 %v161
    %186 = vmatpush.msra.mxu0 %v160
    %187 = vmatpush.msra.mxu0 %v159
    %188 = vmatpush.msra.mxu0 %v158
    %189 = vmatpush.msra.mxu0 %v157
    %190 = vmatpush.msra.mxu0 %v156
    %191 = vmatpush.msra.mxu0 %v155
    %192 = vmatmul.f32.gmra.mxu0 %v153
    %v193 = vpop.f32.mrf.mxu0
    %v194 = vadd.f32 %v174, %v193
    %195 = vdwg.mxu0
    %196 = vst [vmem:[%s4] sm:$0xff] %v194
    // Predicated region
    $region34: #{_forward_impl.1} parent=1 // pred_check
      _
    $region35: #{_forward_impl.1} parent=1 // pred_check_branch
      %198 = sbr.rel (0) target = $region37
    $region36: #{_forward_impl.1} parent=1 // pred_region
      _
    $region37: #{_forward_impl.1} parent=1 // pred_fallthru
      _
    // Predicated region
    $region38: #{_forward_impl.1} parent=1 // pred_check
      _
    $region39: #{_forward_impl.1} parent=1 // pred_check_branch
      %200 = sbr.rel (0) target = $region41
    $region40: #{_forward_impl.1} parent=1 // pred_region
      _
    $region41: #{_forward_impl.1} parent=1 // pred_fallthru
      _
    %201 = vsyncpa [#allocation3], 1
    %202 = vsyncpa [#allocation5], 1
    %203 = vsyncpa [#allocation8], 1

</llo_original>
